<compile_context>
chip_gen: v7x
topology: tpu7x:2x2x1
jax: 0.10.0
libtpu: 0.0.40
codegen_flags: <defaults>
</compile_context>

<pallas_src>
import jax
import jax.numpy as jnp
from jax.experimental import pallas as pl
from jax.experimental.pallas import tpu as pltpu


def _round_up(x, m):
    return (x + m - 1) // m * m


def _pick_block(total, target, align=128):
    """Largest multiple of `align` that divides `total` and is <= target.

    `total` must itself be a multiple of `align` (so `align` always works).
    """
    target = max(align, min(target, total))
    b = (target // align) * align
    while b > align and total % b != 0:
        b -= align
    return b


def _gated_mlp_kernel(x_ref, w1g_ref, w1v_ref, b1g_ref, b1v_ref, w2_ref, b2_ref,
                      o_ref, acc_ref):
    # Grid: (batch tile i, Dout tile j, hidden chunk k).  acc_ref is a
    # (block_m, block_n) f32 accumulator resident across the k (reduction) axis.
    k = pl.program_id(2)

    @pl.when(k == 0)
    def _init():
        acc_ref[...] = jnp.zeros_like(acc_ref)

    x = x_ref[...]
    # Two separate lane-dense MXU dots (gate / value) -- no lane slicing of a
    # (.., 2H) tile (lane slices are not views on TPU).
    h1 = jnp.dot(x, w1g_ref[...], preferred_element_type=jnp.float32) + b1g_ref[...]
    h2 = jnp.dot(x, w1v_ref[...], preferred_element_type=jnp.float32) + b1v_ref[...]
    # SiLU(gate) * value, elementwise in f32 (sigmoid on EUP, muls on VPU).
    g = (h1 * jax.nn.sigmoid(h1)) * h2
    # Down-projection: cast g to the weight dtype (bf16 weights -> full-rate
    # MXU); accumulate the partial product in f32.
    acc_ref[...] += jnp.dot(g.astype(w2_ref.dtype), w2_ref[...],
                            preferred_element_type=jnp.float32)

    @pl.when(k == pl.num_programs(2) - 1)
    def _finalize():
        o_ref[...] = (acc_ref[...] + b2_ref[...]).astype(o_ref.dtype)


def prepare_gated_mlp_params(w1, b1, w2, b2, *, param_dtype=None):
    """One-time parameter preparation (do at model-setup time, NOT per call).

    w1: (D, 2H)   = fc.weight.T      b1: (2H,)
    w2: (H, Dout) = proj.weight.T    b2: (Dout,)

    Splits W1/b1 into gate/value halves (torch `.chunk(2, dim=-1)`) and
    zero-pads all operands to multiples of 128 on both dims, so the per-call
    path never slices/pads (i.e. copies) the weights.  Pass
    param_dtype=jnp.bfloat16 for full-rate MXU and halved weight HBM traffic.
    """
    D, two_h = w1.shape
    assert two_h % 2 == 0
    H = two_h // 2
    Hw, Dout = w2.shape
    assert Hw == H and b1.shape == (two_h,) and b2.shape == (Dout,)
    assert jnp.issubdtype(w1.dtype, jnp.floating), "weights must be floating point"
    assert jnp.issubdtype(w2.dtype, jnp.floating), "weights must be floating point"

    if param_dtype is not None:
        w1 = w1.astype(param_dtype)
        w2 = w2.astype(param_dtype)

    D_p = _round_up(D, 128)
    H_p = _round_up(H, 128)
    Do_p = _round_up(Dout, 128)

    def pad2(a, rows, cols):
        if a.shape == (rows, cols):
            return a                      # already aligned: no copy emitted
        return jnp.pad(a, ((0, rows - a.shape[0]), (0, cols - a.shape[1])))

    b1f = b1.astype(jnp.float32)
    b2f = b2.astype(jnp.float32)
    return dict(
        w1g=pad2(w1[:, :H], D_p, H_p),
        w1v=pad2(w1[:, H:], D_p, H_p),
        b1g=pad2(b1f[:H].reshape(1, H), 1, H_p),
        b1v=pad2(b1f[H:].reshape(1, H), 1, H_p),
        w2=pad2(w2, H_p, Do_p),
        b2=pad2(b2f.reshape(1, Dout), 1, Do_p),
        in_dim=D,
        out_dim=Dout,
    )


def gated_mlp(x, params, *, block_m=None, block_h=None, block_n=None):
    """Fused SwiGLU MLP:  y = (SiLU(x @ W1g + b1g) * (x @ W1v + b1v)) @ W2 + b2.

    x: (B, D); params from `prepare_gated_mlp_params`.
    """
    w1g, w1v = params["w1g"], params["w1v"]
    b1g, b1v = params["b1g"], params["b1v"]
    w2, b2 = params["w2"], params["b2"]
    Dout = params["out_dim"]

    B, D = x.shape
    D_p, H_p = w1g.shape
    Do_p = w2.shape[1]
    assert D == params["in_dim"] and D <= D_p
    assert w1v.shape == (D_p, H_p) and w2.shape == (H_p, Do_p)
    assert D_p % 128 == 0 and H_p % 128 == 0 and Do_p % 128 == 0

    xb = jnp.dtype(x.dtype).itemsize
    wb = jnp.dtype(w2.dtype).itemsize

    # ---- Tile sizes --------------------------------------------------------
    # Batch: one tile as large as possible (cap 512).  No forced batch split:
    # every extra batch tile re-streams all weights from HBM, and on 1-TC
    # chips "parallel" grid axes are just a serial loop.
    if block_m is None:
        block_m = min(512, _round_up(B, 8))
    block_m = max(8, _round_up(block_m, 8))

    # Hidden chunk: multiple of 128 dividing H_p.  Larger chunks at small B
    # (weight-DMA-bound regime) -> longer weight DMAs, fewer grid steps and
    # fewer accumulator read-modify-writes per step.
    if block_h is None:
        block_h = 2048 if B <= 64 else 512
    block_h = _pick_block(H_p, block_h)

    # Dout tile: by default cover all of Dout (no W1 re-streaming).  The
    # auto-shrink loop below introduces Dout tiling only when the accumulator
    # + out + W2 tiles would exceed the VMEM budget (v7x's 64 MiB per TC);
    # v7x callers with tiny B can also pass block_n explicitly to hand the
    # second TensorCore a parallel axis.
    if block_n is None:
        block_n = Do_p
    block_n = _pick_block(Do_p, block_n)

    # ---- Generation-aware VMEM budget + auto-shrink -------------------------
    try:
        vmem_cap = int(pltpu.get_tpu_info().vmem_capacity_bytes)
    except Exception:
        vmem_cap = 64 * 1024 * 1024   # conservative fallback (legal everywhere)
    budget = int(vmem_cap * 0.85)

    def footprint(bm, bh, bn):
        f = 0
        f += 2 * bm * D_p * xb            # x tile (double-buffered)
        f += 2 * 2 * D_p * bh * wb        # W1 gate + value tiles
        f += 2 * 2 * bh * 4               # b1 gate + value tiles (f32)
        f += 2 * bh * bn * wb             # W2 tile
        f += 2 * bn * 4                   # b2 tile
        f += 2 * bm * bn * xb             # out tile
        f += bm * bn * 4                  # f32 accumulator scratch
        f += 4 * bm * bh * 4              # h1 / h2 / g f32 intermediates
        return f

    # Shrink order keeps block_m (compute intensity) large as long as possible:
    # Dout tile first (also shrinks per-step acc RMW), then hidden chunk, then
    # batch tile.
    while footprint(block_m, block_h, block_n) > budget:
        if block_n > 512:
            block_n = _pick_block(Do_p, block_n // 2)
        elif block_h > 512:
            block_h = _pick_block(H_p, block_h // 2)
        elif block_m > 128:
            block_m = _round_up(block_m // 2, 8)
        elif block_n > 128:
            block_n = _pick_block(Do_p, block_n // 2)
        elif block_h > 128:
            block_h = _pick_block(H_p, block_h // 2)
        elif block_m > 8:
            block_m = _round_up(block_m // 2, 8)
        else:
            break

    B_p = _round_up(B, block_m)

    # ---- Activation padding (cheap; weights were padded once in prepare) ----
    if x.shape != (B_p, D_p):
        x = jnp.pad(x, ((0, B_p - B), (0, D_p - D)))

    grid = (B_p // block_m, Do_p // block_n, H_p // block_h)

    fp = footprint(block_m, block_h, block_n)
    vmem_limit = int(min(budget, max(int(1.3 * fp), 32 * 1024 * 1024)))

    # Advisory cost model for XLA scheduling around the custom call.
    cost = pl.CostEstimate(
        flops=2 * B_p * D_p * (2 * H_p) + 2 * B_p * H_p * Do_p,
        transcendentals=B_p * H_p,
        bytes_accessed=(B_p * D_p * xb + 2 * D_p * H_p * wb + H_p * Do_p * wb
                        + 2 * H_p * 4 + Do_p * 4 + B_p * Do_p * xb),
    )

    out_p = pl.pallas_call(
        _gated_mlp_kernel,
        out_shape=jax.ShapeDtypeStruct((B_p, Do_p), x.dtype),
        grid_spec=pltpu.PrefetchScalarGridSpec(
            num_scalar_prefetch=0,
            grid=grid,
            in_specs=[
                pl.BlockSpec((block_m, D_p), lambda i, j, k: (i, 0)),      # x
                pl.BlockSpec((D_p, block_h), lambda i, j, k: (0, k)),      # W1 gate
                pl.BlockSpec((D_p, block_h), lambda i, j, k: (0, k)),      # W1 value
                pl.BlockSpec((1, block_h), lambda i, j, k: (0, k)),        # b1 gate
                pl.BlockSpec((1, block_h), lambda i, j, k: (0, k)),        # b1 value
                pl.BlockSpec((block_h, block_n), lambda i, j, k: (k, j)),  # W2
                pl.BlockSpec((1, block_n), lambda i, j, k: (0, j)),        # b2
            ],
            out_specs=pl.BlockSpec((block_m, block_n), lambda i, j, k: (i, j)),
            scratch_shapes=[pltpu.VMEM((block_m, block_n), jnp.float32)],
        ),
        compiler_params=pltpu.CompilerParams(
            dimension_semantics=("parallel", "parallel", "arbitrary"),
            vmem_limit_bytes=vmem_limit,
        ),
        cost_estimate=cost,
    )(x, w1g, w1v, b1g, b1v, w2, b2)

    return out_p[:B, :Dout]


def _xavier_uniform(key, fan_out, fan_in, dtype=jnp.float32):
    # Matches nn.init.xavier_uniform_ on a (fan_out, fan_in) weight.
    bound = (6.0 / (fan_in + fan_out)) ** 0.5
    return jax.random.uniform(key, (fan_out, fan_in), dtype, -bound, bound)


def gated_mlp_ref(x, w1, b1, w2, b2):
    h = x @ w1 + b1
    H = w1.shape[1] // 2
    h1, h2 = h[:, :H], h[:, H:]
    return (jax.nn.silu(h1) * h2) @ w2 + b2


if __name__ == "__main__":
    # Small shapes consistent with the module: input_dim=32 -> hidden=64 -> out=32.
    B, D = 8, 32
    H = D * 2          # hidden_dim default = input_dim * 2
    Dout = D           # output_dim default = input_dim

    key = jax.random.PRNGKey(0)
    kx, k1, k2 = jax.random.split(key, 3)

    x = jax.random.normal(kx, (B, D), jnp.float32)

    # PyTorch nn.Linear weights: fc.weight (2H, D), proj.weight (Dout, H); biases zero.
    w_fc = _xavier_uniform(k1, 2 * H, D)        # (2H, D)
    w_proj = _xavier_uniform(k2, Dout, H)       # (Dout, H)
    b_fc = jnp.zeros((2 * H,), jnp.float32)
    b_proj = jnp.zeros((Dout,), jnp.float32)

    # Pre-transpose to the kernel's y = x @ W convention.
    w1 = w_fc.T        # (D, 2H)
    w2 = w_proj.T      # (H, Dout)

    # One-time parameter prep (split + pad).  The per-call path below performs
    # no weight slicing/padding copies.  (Pass param_dtype=jnp.bfloat16 in
    # production for full-rate MXU; kept f32 here for a tight reference check.)
    params = prepare_gated_mlp_params(w1, b_fc, w2, b_proj)

    out = gated_mlp(x, params)
    out = jax.block_until_ready(out)

    ref = gated_mlp_ref(x, w1, b_fc, w2, b_proj)
    assert out.shape == (B, Dout)
    assert jnp.allclose(out, ref, atol=1e-4, rtol=1e-4), "mismatch vs reference"

    print("KERNEL_OK")
</pallas_src>

<mosaic_0001>
module attributes {stable_mosaic.version = 11 : i64} {
  func.func @_gated_mlp_kernel(%arg0: i32, %arg1: i32, %arg2: i32, %arg3: memref<8x128xf32, #tpu.memory_space<vmem>>, %arg4: memref<128x128xf32, #tpu.memory_space<vmem>>, %arg5: memref<128x128xf32, #tpu.memory_space<vmem>>, %arg6: memref<1x128xf32, #tpu.memory_space<vmem>>, %arg7: memref<1x128xf32, #tpu.memory_space<vmem>>, %arg8: memref<128x128xf32, #tpu.memory_space<vmem>>, %arg9: memref<1x128xf32, #tpu.memory_space<vmem>>, %arg10: memref<8x128xf32, #tpu.memory_space<vmem>>, %arg11: memref<8x128xf32, #tpu.memory_space<vmem>>) attributes {dimension_semantics = [#tpu.dimension_semantics<parallel>, #tpu.dimension_semantics<parallel>, #tpu.dimension_semantics<arbitrary>], iteration_bounds = array<i64: 1, 1, 1>, scalar_prefetch = 0 : i64, scratch_operands = 1 : i64, tpu.core_type = #tpu.core_type<tc>, window_params = [{transform_indices = @transform_0, window_bounds = array<i64: 8, 128>}, {transform_indices = @transform_1, window_bounds = array<i64: 128, 128>}, {transform_indices = @transform_2, window_bounds = array<i64: 128, 128>}, {transform_indices = @transform_3, window_bounds = array<i64: 1, 128>}, {transform_indices = @transform_4, window_bounds = array<i64: 1, 128>}, {transform_indices = @transform_5, window_bounds = array<i64: 128, 128>}, {transform_indices = @transform_6, window_bounds = array<i64: 1, 128>}, {transform_indices = @transform_7, window_bounds = array<i64: 8, 128>}]} {
    %c0_i32 = arith.constant 0 : i32
    %0 = arith.cmpi eq, %arg2, %c0_i32 : i32
    %1 = arith.extui %0 : i1 to i32
    %c0_i32_0 = arith.constant 0 : i32
    %2 = arith.cmpi ne, %1, %c0_i32_0 : i32
    scf.if %2 {
      %cst_21 = arith.constant 0.000000e+00 : f32
      %29 = vector.broadcast %cst_21 : f32 to vector<8x128xf32>
      %c0_22 = arith.constant 0 : index
      %c0_23 = arith.constant 0 : index
      %30 = vector.load %arg11[%c0_22, %c0_23] : memref<8x128xf32, #tpu.memory_space<vmem>>, vector<8x128xf32>
      tpu.vector_store %arg11[%c0_22, %c0_23], %29 {strides = array<i32>} : memref<8x128xf32, #tpu.memory_space<vmem>>, vector<8x128xf32>,
    } else {
    }
    %c0 = arith.constant 0 : index
    %c0_1 = arith.constant 0 : index
    %3 = vector.load %arg3[%c0, %c0_1] : memref<8x128xf32, #tpu.memory_space<vmem>>, vector<8x128xf32>
    %c0_2 = arith.constant 0 : index
    %c0_3 = arith.constant 0 : index
    %4 = vector.load %arg4[%c0_2, %c0_3] : memref<128x128xf32, #tpu.memory_space<vmem>>, vector<128x128xf32>
    %cst = arith.constant dense<0.000000e+00> : vector<8x128xf32>
    %5 = tpu.matmul %3, %4, %cst {dimension_numbers = #tpu.dot_dimension_numbers<[1], [0], [0], [1], [0, 0, 1, 1], [], []>} : vector<8x128xf32>, vector<128x128xf32>, vector<8x128xf32> -> vector<8x128xf32>
    %c0_4 = arith.constant 0 : index
    %c0_5 = arith.constant 0 : index
    %6 = vector.load %arg6[%c0_4, %c0_5] : memref<1x128xf32, #tpu.memory_space<vmem>>, vector<1x128xf32>
    %7 = vector.broadcast %6 : vector<1x128xf32> to vector<8x128xf32>
    %8 = arith.addf %5, %7 : vector<8x128xf32>
    %c0_6 = arith.constant 0 : index
    %c0_7 = arith.constant 0 : index
    %9 = vector.load %arg5[%c0_6, %c0_7] : memref<128x128xf32, #tpu.memory_space<vmem>>, vector<128x128xf32>
    %cst_8 = arith.constant dense<0.000000e+00> : vector<8x128xf32>
    %10 = tpu.matmul %3, %9, %cst_8 {dimension_numbers = #tpu.dot_dimension_numbers<[1], [0], [0], [1], [0, 0, 1, 1], [], []>} : vector<8x128xf32>, vector<128x128xf32>, vector<8x128xf32> -> vector<8x128xf32>
    %c0_9 = arith.constant 0 : index
    %c0_10 = arith.constant 0 : index
    %11 = vector.load %arg7[%c0_9, %c0_10] : memref<1x128xf32, #tpu.memory_space<vmem>>, vector<1x128xf32>
    %12 = vector.broadcast %11 : vector<1x128xf32> to vector<8x128xf32>
    %13 = arith.addf %10, %12 : vector<8x128xf32>
    %14 = arith.negf %8 : vector<8x128xf32>
    %15 = math.exp %14 : vector<8x128xf32>
    %cst_11 = arith.constant 1.000000e+00 : f32
    %16 = vector.broadcast %cst_11 : f32 to vector<8x128xf32>
    %17 = arith.addf %16, %15 : vector<8x128xf32>
    %18 = arith.divf %16, %17 : vector<8x128xf32>
    %19 = arith.mulf %8, %18 : vector<8x128xf32>
    %20 = arith.mulf %19, %13 : vector<8x128xf32>
    %c0_12 = arith.constant 0 : index
    %c0_13 = arith.constant 0 : index
    %21 = vector.load %arg11[%c0_12, %c0_13] : memref<8x128xf32, #tpu.memory_space<vmem>>, vector<8x128xf32>
    %c0_14 = arith.constant 0 : index
    %c0_15 = arith.constant 0 : index
    %22 = vector.load %arg8[%c0_14, %c0_15] : memref<128x128xf32, #tpu.memory_space<vmem>>, vector<128x128xf32>
    %cst_16 = arith.constant dense<0.000000e+00> : vector<8x128xf32>
    %23 = tpu.matmul %20, %22, %cst_16 {dimension_numbers = #tpu.dot_dimension_numbers<[1], [0], [0], [1], [0, 0, 1, 1], [], []>} : vector<8x128xf32>, vector<128x128xf32>, vector<8x128xf32> -> vector<8x128xf32>
    %24 = arith.addf %21, %23 : vector<8x128xf32>
    %c0_17 = arith.constant 0 : index
    %c0_18 = arith.constant 0 : index
    %25 = vector.load %arg11[%c0_17, %c0_18] : memref<8x128xf32, #tpu.memory_space<vmem>>, vector<8x128xf32>
    tpu.vector_store %arg11[%c0_17, %c0_18], %24 {strides = array<i32>} : memref<8x128xf32, #tpu.memory_space<vmem>>, vector<8x128xf32>,
    %c0_i32_19 = arith.constant 0 : i32
    %26 = arith.cmpi eq, %arg2, %c0_i32_19 : i32
    %27 = arith.extui %26 : i1 to i32
    %c0_i32_20 = arith.constant 0 : i32
    %28 = arith.cmpi ne, %27, %c0_i32_20 : i32
    scf.if %28 {
      %c0_21 = arith.constant 0 : index
      %c0_22 = arith.constant 0 : index
      %29 = vector.load %arg11[%c0_21, %c0_22] : memref<8x128xf32, #tpu.memory_space<vmem>>, vector<8x128xf32>
      %c0_23 = arith.constant 0 : index
      %c0_24 = arith.constant 0 : index
      %30 = vector.load %arg9[%c0_23, %c0_24] : memref<1x128xf32, #tpu.memory_space<vmem>>, vector<1x128xf32>
      %31 = vector.broadcast %30 : vector<1x128xf32> to vector<8x128xf32>
      %32 = arith.addf %29, %31 : vector<8x128xf32>
      %c0_25 = arith.constant 0 : index
      %c0_26 = arith.constant 0 : index
      %33 = vector.load %arg10[%c0_25, %c0_26] : memref<8x128xf32, #tpu.memory_space<vmem>>, vector<8x128xf32>
      tpu.vector_store %arg10[%c0_25, %c0_26], %32 {strides = array<i32>} : memref<8x128xf32, #tpu.memory_space<vmem>>, vector<8x128xf32>,
    } else {
    }
    return
  }
  func.func @transform_0(%arg0: i32, %arg1: i32, %arg2: i32) -> (i32, i32) {
    %c0_i32 = arith.constant 0 : i32
    %c0_i32_0 = arith.constant 0 : i32
    return %arg0, %c0_i32 : i32, i32
  }
  func.func @transform_1(%arg0: i32, %arg1: i32, %arg2: i32) -> (i32, i32) {
    %c0_i32 = arith.constant 0 : i32
    %c0_i32_0 = arith.constant 0 : i32
    return %c0_i32, %arg2 : i32, i32
  }
  func.func @transform_2(%arg0: i32, %arg1: i32, %arg2: i32) -> (i32, i32) {
    %c0_i32 = arith.constant 0 : i32
    %c0_i32_0 = arith.constant 0 : i32
    return %c0_i32, %arg2 : i32, i32
  }
  func.func @transform_3(%arg0: i32, %arg1: i32, %arg2: i32) -> (i32, i32) {
    %c0_i32 = arith.constant 0 : i32
    %c0_i32_0 = arith.constant 0 : i32
    return %c0_i32, %arg2 : i32, i32
  }
  func.func @transform_4(%arg0: i32, %arg1: i32, %arg2: i32) -> (i32, i32) {
    %c0_i32 = arith.constant 0 : i32
    %c0_i32_0 = arith.constant 0 : i32
    return %c0_i32, %arg2 : i32, i32
  }
  func.func @transform_5(%arg0: i32, %arg1: i32, %arg2: i32) -> (i32, i32) {
    %c0_i32 = arith.constant 0 : i32
    return %arg2, %arg1 : i32, i32
  }
  func.func @transform_6(%arg0: i32, %arg1: i32, %arg2: i32) -> (i32, i32) {
    %c0_i32 = arith.constant 0 : i32
    %c0_i32_0 = arith.constant 0 : i32
    return %c0_i32, %arg1 : i32, i32
  }
  func.func @transform_7(%arg0: i32, %arg1: i32, %arg2: i32) -> (i32, i32) {
    %c0_i32 = arith.constant 0 : i32
    return %arg0, %arg1 : i32, i32
  }
}

</mosaic_0001>

<llo_original>
// kernel: tpu_custom_call.1
$region0: #{tpu_custom_call.1}
  #allocation0 [shape = 'u32[]', space=smem, size = 0x4, offset = 0x4, fixed_abs, tag = 'smem constant byte address 0x4 - core index']
  #allocation1 [shape = 'u32[144,128]{1,0:T(1,128)}', space=vmem, size = 0x12000, scoped, tag = 'internal scratch']
  #allocation2 [shape = 'f32[8,128]{1,0:T(8,128)}', space=vmem, size = 0x1000, scoped, tag = 'scratch operand']
  %s0 = inlined_call_operand.hbm [shape: f32[8,128], index: 0, kind: input, shape index: {}]
  %s1 = inlined_call_operand.hbm [shape: f32[128,128], index: 1, kind: input, shape index: {}]
  %s2 = inlined_call_operand.hbm [shape: f32[128,128], index: 2, kind: input, shape index: {}]
  %s3 = inlined_call_operand.vmem [shape: f32[1,128], index: 3, kind: input, shape index: {}]
  %s4 = inlined_call_operand.vmem [shape: f32[1,128], index: 4, kind: input, shape index: {}]
  %s5 = inlined_call_operand.hbm [shape: f32[128,128], index: 5, kind: input, shape index: {}]
  %s6 = inlined_call_operand.vmem [shape: f32[1,128], index: 6, kind: input, shape index: {}]
  %s7 = inlined_call_operand.hbm [shape: f32[8,128], index: 7, kind: output, shape index: {}]
  %s8 = sld [smem:[#allocation0]]
  $region62: #{tpu_custom_call.1} parent=0
    _
  %s10 = ssub.s32 1, %s8
  %s11 = scalar_select 0, %s10, %s8
  $region1: #{tpu_custom_call.1} parent=0
    #allocation3 [shape = 'u8[4096]{0}', space=vmem, size = 0x1000, scoped, tag = 'input window, operand 0, single buffered']
    #allocation4 [shape = 's32[1]{0}', space=sflag, size = 0x4, scoped, tag = 'scoped memory for tpu_custom_call.1']
    #allocation5 [shape = 's32[1]{0}', space=sflag, size = 0x4, scoped, tag = 'scoped memory for tpu_custom_call.1']
    #allocation6 [shape = 'u8[65536]{0}', space=vmem, size = 0x10000, scoped, tag = 'input window, operand 1, single buffered']
    #allocation7 [shape = 's32[1]{0}', space=sflag, size = 0x4, scoped, tag = 'scoped memory for tpu_custom_call.1']
    #allocation8 [shape = 'u8[65536]{0}', space=vmem, size = 0x10000, scoped, tag = 'input window, operand 2, single buffered']
    #allocation9 [shape = 'u8[65536]{0}', space=vmem, size = 0x10000, scoped, tag = 'input window, operand 5, single buffered']
    #allocation10 [shape = 's32[1]{0}', space=sflag, size = 0x4, scoped, tag = 'scoped memory for tpu_custom_call.1']
    #allocation11 [shape = 'u8[4096]{0}', space=vmem, size = 0x1000, scoped, tag = 'output window, operand 0, single buffered']
    %12 = vsyncpa [#allocation4], 0
    %13 = vsyncpa [#allocation7], 0
    %14 = vsyncpa [#allocation10], 0
    %15 = vsyncpa [#allocation5], 0
    // Predicated region
    $region2: #{tpu_custom_call.1} parent=1 // pred_check
      _
    $region3: #{tpu_custom_call.1} parent=1 // pred_check_branch
      %17 = sbr.rel (0) target = $region5
    $region4: #{tpu_custom_call.1} parent=1 // pred_region
      %s19 = ssub.s32 128, 128
      %20 = vsyncadd [#allocation4], %s19
      %s22 = sshll.u32 [#allocation3], 4
      %s23 = int_to_ptr.vmem [resolvable:$true] %s22
      %25 = dma.hbm_to_vmem [thread:$0]  %s0, 128, %s23, [#allocation4]
    $region5: #{tpu_custom_call.1} parent=1 // pred_fallthru
      _
    // Predicated region
    $region6: #{tpu_custom_call.1} parent=1 // pred_check
      _
    $region7: #{tpu_custom_call.1} parent=1 // pred_check_branch
      %27 = sbr.rel (0) target = $region9
    $region8: #{tpu_custom_call.1} parent=1 // pred_region
      %s29 = ssub.s32 2048, 2048
      %30 = vsyncadd [#allocation7], %s29
      %s31 = sshll.u32 [#allocation6], 4
      %s32 = int_to_ptr.vmem [resolvable:$true] %s31
      %37 = dma.hbm_to_vmem [thread:$0]  %s1, 2048, %s32, [#allocation7], 128, 128, 8
    $region9: #{tpu_custom_call.1} parent=1 // pred_fallthru
      _
    // Predicated region
    $region10: #{tpu_custom_call.1} parent=1 // pred_check
      _
    $region11: #{tpu_custom_call.1} parent=1 // pred_check_branch
      %39 = sbr.rel (0) target = $region13
    $region12: #{tpu_custom_call.1} parent=1 // pred_region
      %s41 = ssub.s32 2048, 2048
      %42 = vsyncadd [#allocation7], %s41
      %s43 = sshll.u32 [#allocation8], 4
      %s44 = int_to_ptr.vmem [resolvable:$true] %s43
      %49 = dma.hbm_to_vmem [thread:$0]  %s2, 2048, %s44, [#allocation7], 128, 128, 8
    $region13: #{tpu_custom_call.1} parent=1 // pred_fallthru
      _
    // Predicated region
    $region14: #{tpu_custom_call.1} parent=1 // pred_check
      _
    $region15: #{tpu_custom_call.1} parent=1 // pred_check_branch
      %51 = sbr.rel (0) target = $region17
    $region16: #{tpu_custom_call.1} parent=1 // pred_region
      _
    $region17: #{tpu_custom_call.1} parent=1 // pred_fallthru
      _
    // Predicated region
    $region18: #{tpu_custom_call.1} parent=1 // pred_check
      _
    $region19: #{tpu_custom_call.1} parent=1 // pred_check_branch
      %53 = sbr.rel (0) target = $region21
    $region20: #{tpu_custom_call.1} parent=1 // pred_region
      _
    $region21: #{tpu_custom_call.1} parent=1 // pred_fallthru
      _
    // Predicated region
    $region22: #{tpu_custom_call.1} parent=1 // pred_check
      _
    $region23: #{tpu_custom_call.1} parent=1 // pred_check_branch
      %55 = sbr.rel (0) target = $region25
    $region24: #{tpu_custom_call.1} parent=1 // pred_region
      %s57 = ssub.s32 2048, 2048
      %58 = vsyncadd [#allocation10], %s57
      %s59 = sshll.u32 [#allocation9], 4
      %s60 = int_to_ptr.vmem [resolvable:$true] %s59
      %65 = dma.hbm_to_vmem [thread:$0]  %s5, 2048, %s60, [#allocation10], 128, 128, 8
    $region25: #{tpu_custom_call.1} parent=1 // pred_fallthru
      _
    // Predicated region
    $region26: #{tpu_custom_call.1} parent=1 // pred_check
      _
    $region27: #{tpu_custom_call.1} parent=1 // pred_check_branch
      %67 = sbr.rel (0) target = $region29
    $region28: #{tpu_custom_call.1} parent=1 // pred_region
      _
    $region29: #{tpu_custom_call.1} parent=1 // pred_fallthru
      _
    // Predicated region
    $region30: #{tpu_custom_call.1} parent=1 // pred_check
      _
    $region31: #{tpu_custom_call.1} parent=1 // pred_check_branch
      %69 = sbr.rel (0) target = $region33
    $region32: #{tpu_custom_call.1} parent=1 // pred_region
      %70 = dma.done [#allocation4], 128
    $region33: #{tpu_custom_call.1} parent=1 // pred_fallthru
      _
    // Predicated region
    $region34: #{tpu_custom_call.1} parent=1 // pred_check
      _
    $region35: #{tpu_custom_call.1} parent=1 // pred_check_branch
      %72 = sbr.rel (0) target = $region37
    $region36: #{tpu_custom_call.1} parent=1 // pred_region
      %73 = dma.done [#allocation7], 2048
    $region37: #{tpu_custom_call.1} parent=1 // pred_fallthru
      _
    // Predicated region
    $region38: #{tpu_custom_call.1} parent=1 // pred_check
      _
    $region39: #{tpu_custom_call.1} parent=1 // pred_check_branch
      %75 = sbr.rel (0) target = $region41
    $region40: #{tpu_custom_call.1} parent=1 // pred_region
      %76 = dma.done [#allocation7], 2048
    $region41: #{tpu_custom_call.1} parent=1 // pred_fallthru
      _
    // Predicated region
    $region42: #{tpu_custom_call.1} parent=1 // pred_check
      _
    $region43: #{tpu_custom_call.1} parent=1 // pred_check_branch
      %78 = sbr.rel (0) target = $region45
    $region44: #{tpu_custom_call.1} parent=1 // pred_region
      %79 = dma.done [#allocation10], 2048
    $region45: #{tpu_custom_call.1} parent=1 // pred_fallthru
      _
    %p80 = scmp.eq.s32.totalorder 0, 0
    // Predicated region
    $region46: #{tpu_custom_call.1} parent=1 // pred_check
      %p81 = pneg %p80
    $region47: #{tpu_custom_call.1} parent=1 // pred_check_branch
      %83 = sbr.rel (%p81) target = $region49
    $region48: #{tpu_custom_call.1} parent=1 // pred_region
      %84 = vst [vmem:[#allocation2] sm:$0xff] 0.0
    $region49: #{tpu_custom_call.1} parent=1 // pred_fallthru
      _
    %v85 = vld [vmem:[#allocation3] sm:$0xff]
    %v86 = vld [vmem:[#allocation6] sm:$0xff]
    %v87 = vld [vmem:[#allocation6 + $0x8] sm:$0xff]
    %v88 = vld [vmem:[#allocation6 + $0x10] sm:$0xff]
    %v89 = vld [vmem:[#allocation6 + $0x18] sm:$0xff]
    %v90 = vld [vmem:[#allocation6 + $0x20] sm:$0xff]
    %v91 = vld [vmem:[#allocation6 + $0x28] sm:$0xff]
    %v92 = vld [vmem:[#allocation6 + $0x30] sm:$0xff]
    %v93 = vld [vmem:[#allocation6 + $0x38] sm:$0xff]
    %v94 = vld [vmem:[#allocation6 + $0x40] sm:$0xff]
    %v95 = vld [vmem:[#allocation6 + $0x48] sm:$0xff]
    %v96 = vld [vmem:[#allocation6 + $0x50] sm:$0xff]
    %v97 = vld [vmem:[#allocation6 + $0x58] sm:$0xff]
    %v98 = vld [vmem:[#allocation6 + $0x60] sm:$0xff]
    %v99 = vld [vmem:[#allocation6 + $0x68] sm:$0xff]
    %v100 = vld [vmem:[#allocation6 + $0x70] sm:$0xff]
    %v101 = vld [vmem:[#allocation6 + $0x78] sm:$0xff]
    %v102 = vld [vmem:[%s3] sm:$0x1]
    %v104 = vlaneseq
    %v105 = vshrl.u32 %v104, 7
    %v106 = vsub.s32 0, %v105
    %v107 = vrot.slane %v102, %v106
    %109 = vmatprep.subr.mxu0 0.0
    %110 = vmatpush1.msra.mxu0 %v86
    %111 = vmatprep.subr.mxu0 0.0
    %112 = vmatpush1.msra.mxu0 %v87
    %113 = vmatprep.subr.mxu0 0.0
    %114 = vmatpush1.msra.mxu0 %v88
    %115 = vmatprep.subr.mxu0 0.0
    %116 = vmatpush1.msra.mxu0 %v89
    %117 = vmatprep.subr.mxu0 0.0
    %118 = vmatpush1.msra.mxu0 %v90
    %119 = vmatprep.subr.mxu0 0.0
    %120 = vmatpush1.msra.mxu0 %v91
    %121 = vmatprep.subr.mxu0 0.0
    %122 = vmatpush1.msra.mxu0 %v92
    %123 = vmatprep.subr.mxu0 0.0
    %124 = vmatpush1.msra.mxu0 %v93
    %125 = vmatprep.subr.mxu0 0.0
    %126 = vmatpush1.msra.mxu0 %v94
    %127 = vmatprep.subr.mxu0 0.0
    %128 = vmatpush1.msra.mxu0 %v95
    %129 = vmatprep.subr.mxu0 0.0
    %130 = vmatpush1.msra.mxu0 %v96
    %131 = vmatprep.subr.mxu0 0.0
    %132 = vmatpush1.msra.mxu0 %v97
    %133 = vmatprep.subr.mxu0 0.0
    %134 = vmatpush1.msra.mxu0 %v98
    %135 = vmatprep.subr.mxu0 0.0
    %136 = vmatpush1.msra.mxu0 %v99
    %137 = vmatprep.subr.mxu0 0.0
    %138 = vmatpush1.msra.mxu0 %v100
    %139 = vmatprep.subr.mxu0 0.0
    %140 = vmatpush1.msra.mxu0 %v101
    %141 = vmatprep.subr.mxu0 0.0
    %142 = vmatpush1.msra.mxu0 0.0
    %143 = vmatprep.subr.mxu0 0.0
    %144 = vmatpush1.msra.mxu0 0.0
    %145 = vmatprep.subr.mxu0 0.0
    %146 = vmatpush1.msra.mxu0 0.0
    %147 = vmatprep.subr.mxu0 0.0
    %148 = vmatpush1.msra.mxu0 0.0
    %149 = vmatprep.subr.mxu0 0.0
    %150 = vmatpush1.msra.mxu0 0.0
    %151 = vmatprep.subr.mxu0 0.0
    %152 = vmatpush1.msra.mxu0 0.0
    %153 = vmatprep.subr.mxu0 0.0
    %154 = vmatpush1.msra.mxu0 0.0
    %155 = vmatprep.subr.mxu0 0.0
    %156 = vmatpush1.msra.mxu0 0.0
    %157 = vmatprep.subr.mxu0 0.0
    %158 = vmatpush1.msra.mxu0 0.0
    %159 = vmatprep.subr.mxu0 0.0
    %160 = vmatpush1.msra.mxu0 0.0
    %161 = vmatprep.subr.mxu0 0.0
    %162 = vmatpush1.msra.mxu0 0.0
    %163 = vmatprep.subr.mxu0 0.0
    %164 = vmatpush1.msra.mxu0 0.0
    %165 = vmatprep.subr.mxu0 0.0
    %166 = vmatpush1.msra.mxu0 0.0
    %167 = vmatprep.subr.mxu0 0.0
    %168 = vmatpush1.msra.mxu0 0.0
    %169 = vmatprep.subr.mxu0 0.0
    %170 = vmatpush1.msra.mxu0 0.0
    %171 = vmatprep.subr.mxu0 0.0
    %172 = vmatpush1.msra.mxu0 0.0
    %173 = vmatprep.mubr.f32.mxu0 0.0
    %174 = vmatmul.mubr.f32.gmra.mrb[0].mxu0 %v85
    %v175 = vpop.f32.mrb[0].mxu0
    %v176 = vadd.f32 %v107, %v175
    %v177 = vpop.f32.mrb[0].mxu0
    %178 = vdwg.mxu0
    %v179 = vld [vmem:[#allocation8] sm:$0xff]
    %v180 = vld [vmem:[#allocation8 + $0x8] sm:$0xff]
    %v181 = vld [vmem:[#allocation8 + $0x10] sm:$0xff]
    %v182 = vld [vmem:[#allocation8 + $0x18] sm:$0xff]
    %v183 = vld [vmem:[#allocation8 + $0x20] sm:$0xff]
    %v184 = vld [vmem:[#allocation8 + $0x28] sm:$0xff]
    %v185 = vld [vmem:[#allocation8 + $0x30] sm:$0xff]
    %v186 = vld [vmem:[#allocation8 + $0x38] sm:$0xff]
    %v187 = vld [vmem:[#allocation8 + $0x40] sm:$0xff]
    %v188 = vld [vmem:[#allocation8 + $0x48] sm:$0xff]
    %v189 = vld [vmem:[#allocation8 + $0x50] sm:$0xff]
    %v190 = vld [vmem:[#allocation8 + $0x58] sm:$0xff]
    %v191 = vld [vmem:[#allocation8 + $0x60] sm:$0xff]
    %v192 = vld [vmem:[#allocation8 + $0x68] sm:$0xff]
    %v193 = vld [vmem:[#allocation8 + $0x70] sm:$0xff]
    %v194 = vld [vmem:[#allocation8 + $0x78] sm:$0xff]
    %v195 = vld [vmem:[%s4] sm:$0x1]
    %v197 = vlaneseq
    %v198 = vshrl.u32 %v197, 7
    %v199 = vsub.s32 0, %v198
    %v200 = vrot.slane %v195, %v199
    %202 = vmatprep.subr.mxu0 0.0
    %203 = vmatpush1.msra.mxu0 %v179
    %204 = vmatprep.subr.mxu0 0.0
    %205 = vmatpush1.msra.mxu0 %v180
    %206 = vmatprep.subr.mxu0 0.0
    %207 = vmatpush1.msra.mxu0 %v181
    %208 = vmatprep.subr.mxu0 0.0
    %209 = vmatpush1.msra.mxu0 %v182
    %210 = vmatprep.subr.mxu0 0.0
    %211 = vmatpush1.msra.mxu0 %v183
    %212 = vmatprep.subr.mxu0 0.0
    %213 = vmatpush1.msra.mxu0 %v184
    %214 = vmatprep.subr.mxu0 0.0
    %215 = vmatpush1.msra.mxu0 %v185
    %216 = vmatprep.subr.mxu0 0.0
    %217 = vmatpush1.msra.mxu0 %v186
    %218 = vmatprep.subr.mxu0 0.0
    %219 = vmatpush1.msra.mxu0 %v187
    %220 = vmatprep.subr.mxu0 0.0
    %221 = vmatpush1.msra.mxu0 %v188
    %222 = vmatprep.subr.mxu0 0.0
    %223 = vmatpush1.msra.mxu0 %v189
    %224 = vmatprep.subr.mxu0 0.0
    %225 = vmatpush1.msra.mxu0 %v190
    %226 = vmatprep.subr.mxu0 0.0
    %227 = vmatpush1.msra.mxu0 %v191
    %228 = vmatprep.subr.mxu0 0.0
    %229 = vmatpush1.msra.mxu0 %v192
    %230 = vmatprep.subr.mxu0 0.0
    %231 = vmatpush1.msra.mxu0 %v193
    %232 = vmatprep.subr.mxu0 0.0
    %233 = vmatpush1.msra.mxu0 %v194
    %234 = vmatprep.subr.mxu0 0.0
    %235 = vmatpush1.msra.mxu0 0.0
    %236 = vmatprep.subr.mxu0 0.0
    %237 = vmatpush1.msra.mxu0 0.0
    %238 = vmatprep.subr.mxu0 0.0
    %239 = vmatpush1.msra.mxu0 0.0
    %240 = vmatprep.subr.mxu0 0.0
    %241 = vmatpush1.msra.mxu0 0.0
    %242 = vmatprep.subr.mxu0 0.0
    %243 = vmatpush1.msra.mxu0 0.0
    %244 = vmatprep.subr.mxu0 0.0
    %245 = vmatpush1.msra.mxu0 0.0
    %246 = vmatprep.subr.mxu0 0.0
    %247 = vmatpush1.msra.mxu0 0.0
    %248 = vmatprep.subr.mxu0 0.0
    %249 = vmatpush1.msra.mxu0 0.0
    %250 = vmatprep.subr.mxu0 0.0
    %251 = vmatpush1.msra.mxu0 0.0
    %252 = vmatprep.subr.mxu0 0.0
    %253 = vmatpush1.msra.mxu0 0.0
    %254 = vmatprep.subr.mxu0 0.0
    %255 = vmatpush1.msra.mxu0 0.0
    %256 = vmatprep.subr.mxu0 0.0
    %257 = vmatpush1.msra.mxu0 0.0
    %258 = vmatprep.subr.mxu0 0.0
    %259 = vmatpush1.msra.mxu0 0.0
    %260 = vmatprep.subr.mxu0 0.0
    %261 = vmatpush1.msra.mxu0 0.0
    %262 = vmatprep.subr.mxu0 0.0
    %263 = vmatpush1.msra.mxu0 0.0
    %264 = vmatprep.subr.mxu0 0.0
    %265 = vmatpush1.msra.mxu0 0.0
    %266 = vmatprep.mubr.f32.mxu0 0.0
    %267 = vmatmul.mubr.f32.gmra.mrb[0].mxu0 %v85
    %v268 = vpop.f32.mrb[0].mxu0
    %v269 = vadd.f32 %v200, %v268
    %v270 = vpop.f32.mrb[0].mxu0
    %271 = vdwg.mxu0
    %v272 = vxor.u32 %v176, 2147483648
    %v273 = vmul.f32 %v272, 1.442695
    %v274 = vpow.pop %v273
    %v275 = vadd.f32 %v274, 1.0
    %v276 = vrcp.pop %v275
    %v277 = vmul.f32 1.0, %v276
    %v278 = vmul.f32 %v176, %v277
    %v279 = vmul.f32 %v278, %v269
    %v280 = vld [vmem:[#allocation2] sm:$0xff]
    %v281 = vld [vmem:[#allocation9] sm:$0xff]
    %v282 = vld [vmem:[#allocation9 + $0x8] sm:$0xff]
    %v283 = vld [vmem:[#allocation9 + $0x10] sm:$0xff]
    %v284 = vld [vmem:[#allocation9 + $0x18] sm:$0xff]
    %v285 = vld [vmem:[#allocation9 + $0x20] sm:$0xff]
    %v286 = vld [vmem:[#allocation9 + $0x28] sm:$0xff]
    %v287 = vld [vmem:[#allocation9 + $0x30] sm:$0xff]
    %v288 = vld [vmem:[#allocation9 + $0x38] sm:$0xff]
    %v289 = vld [vmem:[#allocation9 + $0x40] sm:$0xff]
    %v290 = vld [vmem:[#allocation9 + $0x48] sm:$0xff]
    %v291 = vld [vmem:[#allocation9 + $0x50] sm:$0xff]
    %v292 = vld [vmem:[#allocation9 + $0x58] sm:$0xff]
    %v293 = vld [vmem:[#allocation9 + $0x60] sm:$0xff]
    %v294 = vld [vmem:[#allocation9 + $0x68] sm:$0xff]
    %v295 = vld [vmem:[#allocation9 + $0x70] sm:$0xff]
    %v296 = vld [vmem:[#allocation9 + $0x78] sm:$0xff]
    %297 = vmatprep.subr.mxu0 0.0
    %298 = vmatpush1.msra.mxu0 %v281
    %299 = vmatprep.subr.mxu0 0.0
    %300 = vmatpush1.msra.mxu0 %v282
    %301 = vmatprep.subr.mxu0 0.0
    %302 = vmatpush1.msra.mxu0 %v283
    %303 = vmatprep.subr.mxu0 0.0
    %304 = vmatpush1.msra.mxu0 %v284
    %305 = vmatprep.subr.mxu0 0.0
    %306 = vmatpush1.msra.mxu0 %v285
    %307 = vmatprep.subr.mxu0 0.0
    %308 = vmatpush1.msra.mxu0 %v286
    %309 = vmatprep.subr.mxu0 0.0
    %310 = vmatpush1.msra.mxu0 %v287
    %311 = vmatprep.subr.mxu0 0.0
    %312 = vmatpush1.msra.mxu0 %v288
    %313 = vmatprep.subr.mxu0 0.0
    %314 = vmatpush1.msra.mxu0 %v289
    %315 = vmatprep.subr.mxu0 0.0
    %316 = vmatpush1.msra.mxu0 %v290
    %317 = vmatprep.subr.mxu0 0.0
    %318 = vmatpush1.msra.mxu0 %v291
    %319 = vmatprep.subr.mxu0 0.0
    %320 = vmatpush1.msra.mxu0 %v292
    %321 = vmatprep.subr.mxu0 0.0
    %322 = vmatpush1.msra.mxu0 %v293
    %323 = vmatprep.subr.mxu0 0.0
    %324 = vmatpush1.msra.mxu0 %v294
    %325 = vmatprep.subr.mxu0 0.0
    %326 = vmatpush1.msra.mxu0 %v295
    %327 = vmatprep.subr.mxu0 0.0
    %328 = vmatpush1.msra.mxu0 %v296
    %329 = vmatprep.subr.mxu0 0.0
    %330 = vmatpush1.msra.mxu0 0.0
    %331 = vmatprep.subr.mxu0 0.0
    %332 = vmatpush1.msra.mxu0 0.0
    %333 = vmatprep.subr.mxu0 0.0
    %334 = vmatpush1.msra.mxu0 0.0
    %335 = vmatprep.subr.mxu0 0.0
    %336 = vmatpush1.msra.mxu0 0.0
    %337 = vmatprep.subr.mxu0 0.0
    %338 = vmatpush1.msra.mxu0 0.0
    %339 = vmatprep.subr.mxu0 0.0
    %340 = vmatpush1.msra.mxu0 0.0
    %341 = vmatprep.subr.mxu0 0.0
    %342 = vmatpush1.msra.mxu0 0.0
    %343 = vmatprep.subr.mxu0 0.0
    %344 = vmatpush1.msra.mxu0 0.0
    %345 = vmatprep.subr.mxu0 0.0
    %346 = vmatpush1.msra.mxu0 0.0
    %347 = vmatprep.subr.mxu0 0.0
    %348 = vmatpush1.msra.mxu0 0.0
    %349 = vmatprep.subr.mxu0 0.0
    %350 = vmatpush1.msra.mxu0 0.0
    %351 = vmatprep.subr.mxu0 0.0
    %352 = vmatpush1.msra.mxu0 0.0
    %353 = vmatprep.subr.mxu0 0.0
    %354 = vmatpush1.msra.mxu0 0.0
    %355 = vmatprep.subr.mxu0 0.0
    %356 = vmatpush1.msra.mxu0 0.0
    %357 = vmatprep.subr.mxu0 0.0
    %358 = vmatpush1.msra.mxu0 0.0
    %359 = vmatprep.subr.mxu0 0.0
    %360 = vmatpush1.msra.mxu0 0.0
    %361 = vmatprep.mubr.f32.mxu0 0.0
    %362 = vmatmul.mubr.f32.gmra.mrb[0].mxu0 %v279
    %v363 = vpop.f32.mrb[0].mxu0
    %v364 = vadd.f32 0.0, %v363
    %v365 = vpop.f32.mrb[0].mxu0
    %366 = vdwg.mxu0
    %v367 = vadd.f32 %v280, %v364
    %368 = vst [vmem:[#allocation2] sm:$0xff] %v367
    // Predicated region
    $region50: #{tpu_custom_call.1} parent=1 // pred_check
      %p369 = pneg %p80
    $region51: #{tpu_custom_call.1} parent=1 // pred_check_branch
      %371 = sbr.rel (%p369) target = $region53
    $region52: #{tpu_custom_call.1} parent=1 // pred_region
      %v372 = vld [vmem:[#allocation2] sm:$0xff]
      %v373 = vld [vmem:[%s6] sm:$0x1]
      %v375 = vlaneseq
      %v376 = vshrl.u32 %v375, 7
      %v377 = vsub.s32 0, %v376
      %v378 = vrot.slane %v373, %v377
      %v380 = vadd.f32 %v372, %v378
      %381 = vst [vmem:[#allocation11] sm:$0xff] %v380
    $region53: #{tpu_custom_call.1} parent=1 // pred_fallthru
      _
    // Predicated region
    $region54: #{tpu_custom_call.1} parent=1 // pred_check
      _
    $region55: #{tpu_custom_call.1} parent=1 // pred_check_branch
      %383 = sbr.rel (0) target = $region57
    $region56: #{tpu_custom_call.1} parent=1 // pred_region
      %s385 = ssub.s32 128, 128
      %386 = vsyncadd [#allocation5], %s385
      %s388 = sshll.u32 [#allocation11], 4
      %s389 = int_to_ptr.vmem [resolvable:$true] %s388
      %391 = dma.vmem_to_hbm [thread:$0]  %s389, 128, %s7, [#allocation5]
    $region57: #{tpu_custom_call.1} parent=1 // pred_fallthru
      _
    // Predicated region
    $region58: #{tpu_custom_call.1} parent=1 // pred_check
      _
    $region59: #{tpu_custom_call.1} parent=1 // pred_check_branch
      %393 = sbr.rel (0) target = $region61
    $region60: #{tpu_custom_call.1} parent=1 // pred_region
      %394 = dma.done [#allocation5], 128
    $region61: #{tpu_custom_call.1} parent=1 // pred_fallthru
      _
    %395 = vsyncpa [#allocation4], 1
    %396 = vsyncpa [#allocation7], 1
    %397 = vsyncpa [#allocation10], 1
    %398 = vsyncpa [#allocation5], 1

</llo_original>
